<compile_context>
chip_gen: v5e
topology: v5e:2x2
jax: 0.10.0
libtpu: 0.0.40
codegen_flags: <defaults>
</compile_context>

<pallas_src>
import functools

import jax
import jax.numpy as jnp
from jax.experimental import pallas as pl
from jax.experimental.pallas import tpu as pltpu

EPS = 1e-6


def _sublayer_connection_kernel(x_ref, a_ref, b_ref, w_ref, wb_ref, o_ref, *, d):
    """One (tm, D) row tile: LayerNorm -> bf16 Linear (MXU, f32 acc) -> residual."""
    x = x_ref[...].astype(jnp.float32)                        # (tm, D), f32 math

    # ---- LayerNorm (torch semantics: unbiased std, eps added to the std) ----
    mean = jnp.sum(x, axis=-1, keepdims=True) * (1.0 / d)
    xc = x - mean
    var_unbiased = jnp.sum(xc * xc, axis=-1, keepdims=True) * (1.0 / (d - 1))
    inv = pl.reciprocal(jnp.sqrt(var_unbiased) + EPS, approx=True)   # EUP slot
    ln = xc * (a_ref[...] * inv) + b_ref[...]                  # fused per-row scale

    # ---- sublayer: Linear(D, D) on the MXU in bf16, accumulate in f32 ----
    sub = jnp.dot(ln.astype(jnp.bfloat16), w_ref[...],
                  preferred_element_type=jnp.float32) + wb_ref[...]

    # ---- dropout (eval mode) = identity; residual add ----
    o_ref[...] = (x + sub).astype(o_ref.dtype)


def _vmem_budget_bytes():
    """~82% of physical per-core VMEM (v5e/v6e: 128 MiB -> ~105, v7x: 64 -> ~52)."""
    try:
        cap = int(pltpu.get_tpu_info().vmem_capacity_bytes)
    except Exception:
        cap = 64 << 20            # conservative fallback
    return int(cap * 0.82)


def sublayer_connection(x, a_2, b_2, w_sub, b_sub, *, tm=None):
    """x: [B, S, D] -> [B, S, D]."""
    B, S, D = x.shape
    assert D >= 2, "unbiased std needs >= 2 features (torch gives NaN for D == 1)"
    R = B * S
    x2 = x.reshape(R, D)                        # unpadded: no extra HBM passes

    a2 = a_2.reshape(1, D).astype(jnp.float32)
    b2 = b_2.reshape(1, D).astype(jnp.float32)
    wb = b_sub.reshape(1, D).astype(jnp.float32)
    w = w_sub.astype(jnp.bfloat16)              # bf16 weight onto the MXU

    # ---- VMEM budget -> row tile -------------------------------------------
    budget = _vmem_budget_bytes()
    itemsize = jnp.dtype(x.dtype).itemsize
    # Resident (single-buffered) operands + fixed compiler-scratch headroom.
    resident = D * D * 2 + 4 * D * 4 + (2 << 20)
    # Per-row cost: double-buffered x and out tiles + f32 kernel intermediates
    # (x_f32, xc, ln, sub and broadcast temps).
    per_row = 2 * D * itemsize + 2 * D * itemsize + 6 * D * 4
    avail = budget - resident
    # TODO(synk): if avail <= 0 (weight alone exceeds the VMEM budget, i.e.
    # very large D) switch to the N/K-tiled weight path described above.
    tm_max = max(8, avail // per_row)
    if tm is None:
        tm = 1024                               # 512-1024 ~ 85% of HBM roofline
    tm = int(min(tm, tm_max))
    if R <= tm:
        tm = R                                  # full extent -> always legal block
    else:
        tm = max(8, (tm // 8) * 8)              # f32 sublane multiple
    grid = (pl.cdiv(R, tm),)

    kernel = functools.partial(_sublayer_connection_kernel, d=D)

    # Whole-array, resident-in-VMEM (not pipelined, single copy) operands.
    resident_vmem_spec = pl.BlockSpec(memory_space=pltpu.MemorySpace.VMEM)

    out2 = pl.pallas_call(
        kernel,
        out_shape=jax.ShapeDtypeStruct((R, D), x.dtype),
        grid_spec=pltpu.PrefetchScalarGridSpec(
            num_scalar_prefetch=0,
            grid=grid,
            in_specs=[
                pl.BlockSpec((tm, D), lambda i: (i, 0)),   # x row tile (pipelined)
                resident_vmem_spec,                        # a_2  (1, D) f32
                resident_vmem_spec,                        # b_2  (1, D) f32
                resident_vmem_spec,                        # W    (D, D) bf16
                resident_vmem_spec,                        # sublayer bias (1, D) f32
            ],
            out_specs=pl.BlockSpec((tm, D), lambda i: (i, 0)),
        ),
        compiler_params=pltpu.CompilerParams(
            dimension_semantics=("parallel",),
            vmem_limit_bytes=int(budget)),
    )(x2, a2, b2, w, wb)

    return out2.reshape(B, S, D)


def _reference(x, a_2, b_2, w_sub, b_sub):
    # pure-JAX f32 reference matching the PyTorch module
    mean = jnp.mean(x, axis=-1, keepdims=True)
    xc = x - mean
    d = x.shape[-1]
    std = jnp.sqrt(jnp.sum(xc * xc, axis=-1, keepdims=True) / (d - 1))
    ln = a_2 * xc / (std + EPS) + b_2
    sub = ln @ w_sub + b_sub
    return x + sub


if __name__ == "__main__":
    B, S, D = 2, 8, 32  # batch, seq, hidden (size = D)

    key = jax.random.PRNGKey(0)
    kx, kw, kb = jax.random.split(key, 3)

    x = jax.random.normal(kx, (B, S, D), dtype=jnp.float32)

    # LayerNorm params per module __init__: a_2 = ones, b_2 = zeros
    a_2 = jnp.ones((D,), dtype=jnp.float32)
    b_2 = jnp.zeros((D,), dtype=jnp.float32)

    # Deterministic sublayer: Linear(D, D)
    w_sub = jax.random.normal(kw, (D, D), dtype=jnp.float32) * (1.0 / jnp.sqrt(D))
    b_sub = jax.random.normal(kb, (D,), dtype=jnp.float32) * 0.01

    out = sublayer_connection(x, a_2, b_2, w_sub, b_sub)
    out = jax.block_until_ready(out)

    ref = _reference(x, a_2, b_2, w_sub, b_sub)
    assert out.shape == (B, S, D)
    # Tolerance relaxed vs. the f32 reference because the linear runs in bf16
    # on the MXU (f32 accumulation) and the reciprocal is the EUP approx op.
    assert jnp.allclose(out, ref, atol=3e-2, rtol=3e-2), "mismatch vs reference"

    print("KERNEL_OK")
</pallas_src>

<mosaic_0001>
module attributes {stable_mosaic.version = 11 : i64} {
  func.func @_sublayer_connection_kernel(%arg0: i32, %arg1: memref<16x32xf32, #tpu.memory_space<vmem>>, %arg2: memref<1x32xf32, #tpu.memory_space<vmem>>, %arg3: memref<1x32xf32, #tpu.memory_space<vmem>>, %arg4: memref<32x32xbf16, #tpu.memory_space<vmem>>, %arg5: memref<1x32xf32, #tpu.memory_space<vmem>>, %arg6: memref<16x32xf32, #tpu.memory_space<vmem>>) attributes {dimension_semantics = [#tpu.dimension_semantics<parallel>], iteration_bounds = array<i64: 1>, scalar_prefetch = 0 : i64, scratch_operands = 0 : i64, tpu.core_type = #tpu.core_type<tc>, window_params = [{transform_indices = @transform_0, window_bounds = array<i64: 16, 32>}, {pipeline_mode = #tpu.pipeline_mode<synchronous>, transform_indices = @transform_1, window_bounds = array<i64: 1, 32>}, {pipeline_mode = #tpu.pipeline_mode<synchronous>, transform_indices = @transform_2, window_bounds = array<i64: 1, 32>}, {pipeline_mode = #tpu.pipeline_mode<synchronous>, transform_indices = @transform_3, window_bounds = array<i64: 32, 32>}, {pipeline_mode = #tpu.pipeline_mode<synchronous>, transform_indices = @transform_4, window_bounds = array<i64: 1, 32>}, {transform_indices = @transform_5, window_bounds = array<i64: 16, 32>}]} {
    %c0 = arith.constant 0 : index
    %c0_0 = arith.constant 0 : index
    %0 = vector.load %arg1[%c0, %c0_0] : memref<16x32xf32, #tpu.memory_space<vmem>>, vector<16x32xf32>
    %cst = arith.constant dense<0.000000e+00> : vector<16xf32>
    %1 = vector.multi_reduction <add>, %0, %cst [1] : vector<16x32xf32> to vector<16xf32>
    %2 = vector.shape_cast %1 : vector<16xf32> to vector<16x1xf32>
    %cst_1 = arith.constant 3.125000e-02 : f32
    %3 = vector.broadcast %cst_1 : f32 to vector<16x1xf32>
    %4 = arith.mulf %2, %3 : vector<16x1xf32>
    %5 = vector.broadcast %4 : vector<16x1xf32> to vector<16x32xf32>
    %6 = arith.subf %0, %5 : vector<16x32xf32>
    %7 = arith.mulf %6, %6 : vector<16x32xf32>
    %cst_2 = arith.constant dense<0.000000e+00> : vector<16xf32>
    %8 = vector.multi_reduction <add>, %7, %cst_2 [1] : vector<16x32xf32> to vector<16xf32>
    %9 = vector.shape_cast %8 : vector<16xf32> to vector<16x1xf32>
    %cst_3 = arith.constant 0.0322580636 : f32
    %10 = vector.broadcast %cst_3 : f32 to vector<16x1xf32>
    %11 = arith.mulf %9, %10 : vector<16x1xf32>
    %12 = math.sqrt %11 : vector<16x1xf32>
    %cst_4 = arith.constant 9.99999997E-7 : f32
    %13 = vector.broadcast %cst_4 : f32 to vector<16x1xf32>
    %14 = arith.addf %12, %13 : vector<16x1xf32>
    %15 = tpu.reciprocal %14 {approx = true} : vector<16x1xf32> -> vector<16x1xf32>
    %c0_5 = arith.constant 0 : index
    %c0_6 = arith.constant 0 : index
    %16 = vector.load %arg2[%c0_5, %c0_6] : memref<1x32xf32, #tpu.memory_space<vmem>>, vector<1x32xf32>
    %17 = vector.broadcast %16 : vector<1x32xf32> to vector<16x32xf32>
    %18 = vector.broadcast %15 : vector<16x1xf32> to vector<16x32xf32>
    %19 = arith.mulf %17, %18 : vector<16x32xf32>
    %20 = arith.mulf %6, %19 : vector<16x32xf32>
    %c0_7 = arith.constant 0 : index
    %c0_8 = arith.constant 0 : index
    %21 = vector.load %arg3[%c0_7, %c0_8] : memref<1x32xf32, #tpu.memory_space<vmem>>, vector<1x32xf32>
    %22 = vector.broadcast %21 : vector<1x32xf32> to vector<16x32xf32>
    %23 = arith.addf %20, %22 : vector<16x32xf32>
    %24 = arith.truncf %23 : vector<16x32xf32> to vector<16x32xbf16>
    %c0_9 = arith.constant 0 : index
    %c0_10 = arith.constant 0 : index
    %25 = vector.load %arg4[%c0_9, %c0_10] : memref<32x32xbf16, #tpu.memory_space<vmem>>, vector<32x32xbf16>
    %cst_11 = arith.constant dense<0.000000e+00> : vector<16x32xf32>
    %26 = tpu.matmul %24, %25, %cst_11 {dimension_numbers = #tpu.dot_dimension_numbers<[1], [0], [0], [1], [0, 0, 1, 1], [], []>} : vector<16x32xbf16>, vector<32x32xbf16>, vector<16x32xf32> -> vector<16x32xf32>
    %c0_12 = arith.constant 0 : index
    %c0_13 = arith.constant 0 : index
    %27 = vector.load %arg5[%c0_12, %c0_13] : memref<1x32xf32, #tpu.memory_space<vmem>>, vector<1x32xf32>
    %28 = vector.broadcast %27 : vector<1x32xf32> to vector<16x32xf32>
    %29 = arith.addf %26, %28 : vector<16x32xf32>
    %30 = arith.addf %0, %29 : vector<16x32xf32>
    %c0_14 = arith.constant 0 : index
    %c0_15 = arith.constant 0 : index
    %31 = vector.load %arg6[%c0_14, %c0_15] : memref<16x32xf32, #tpu.memory_space<vmem>>, vector<16x32xf32>
    tpu.vector_store %arg6[%c0_14, %c0_15], %30 {strides = array<i32>} : memref<16x32xf32, #tpu.memory_space<vmem>>, vector<16x32xf32>,
    return
  }
  func.func @transform_0(%arg0: i32) -> (i32, i32) {
    %c0_i32 = arith.constant 0 : i32
    %c0_i32_0 = arith.constant 0 : i32
    return %arg0, %c0_i32 : i32, i32
  }
  func.func @transform_1(%arg0: i32) -> (i32, i32) {
    %c0_i32 = arith.constant 0 : i32
    %c0_i32_0 = arith.constant 0 : i32
    %c0_i32_1 = arith.constant 0 : i32
    return %c0_i32, %c0_i32_0 : i32, i32
  }
  func.func @transform_2(%arg0: i32) -> (i32, i32) {
    %c0_i32 = arith.constant 0 : i32
    %c0_i32_0 = arith.constant 0 : i32
    %c0_i32_1 = arith.constant 0 : i32
    return %c0_i32, %c0_i32_0 : i32, i32
  }
  func.func @transform_3(%arg0: i32) -> (i32, i32) {
    %c0_i32 = arith.constant 0 : i32
    %c0_i32_0 = arith.constant 0 : i32
    %c0_i32_1 = arith.constant 0 : i32
    return %c0_i32, %c0_i32_0 : i32, i32
  }
  func.func @transform_4(%arg0: i32) -> (i32, i32) {
    %c0_i32 = arith.constant 0 : i32
    %c0_i32_0 = arith.constant 0 : i32
    %c0_i32_1 = arith.constant 0 : i32
    return %c0_i32, %c0_i32_0 : i32, i32
  }
  func.func @transform_5(%arg0: i32) -> (i32, i32) {
    %c0_i32 = arith.constant 0 : i32
    %c0_i32_0 = arith.constant 0 : i32
    return %arg0, %c0_i32 : i32, i32
  }
}

</mosaic_0001>

<llo_original>
// kernel: tpu_custom_call.1
$region0: #{tpu_custom_call.1}
  #allocation0 [shape = 'u32[]', space=smem, size = 0x4, offset = 0x4, fixed_abs, tag = 'smem constant byte address 0x4 - core index']
  #allocation1 [shape = 'u32[72,128]{1,0:T(1,128)}', space=vmem, size = 0x9000, scoped, tag = 'internal scratch']
  %s0 = inlined_call_operand.hbm [shape: f32[16,32], index: 0, kind: input, shape index: {}]
  %s1 = inlined_call_operand.hbm [shape: f32[1,32], index: 1, kind: input, shape index: {}]
  %s2 = inlined_call_operand.vmem [shape: f32[1,32], index: 2, kind: input, shape index: {}]
  %s3 = inlined_call_operand.hbm [shape: bf16[32,32], index: 3, kind: input, shape index: {}]
  %s4 = inlined_call_operand.vmem [shape: f32[1,32], index: 4, kind: input, shape index: {}]
  %s5 = inlined_call_operand.hbm [shape: f32[16,32], index: 5, kind: output, shape index: {}]
  %s6 = sld [smem:[#allocation0]]
  $region42: #{tpu_custom_call.1} parent=0
    _
  %s8 = ssub.s32 1, %s6
  %s9 = scalar_select 0, %s8, %s6
  $region1: #{tpu_custom_call.1} parent=0
    #allocation2 [shape = 'u8[8192]{0}', space=vmem, size = 0x2000, scoped, tag = 'input window, operand 0, single buffered']
    #allocation3 [shape = 's32[1]{0}', space=sflag, size = 0x4, scoped, tag = 'scoped memory for tpu_custom_call.1']
    #allocation4 [shape = 's32[1]{0}', space=sflag, size = 0x4, scoped, tag = 'scoped memory for tpu_custom_call.1']
    #allocation5 [shape = 'u8[512]{0}', space=vmem, size = 0x400, scoped, tag = 'input window, operand 1, single buffered']
    #allocation6 [shape = 's32[1]{0}', space=sflag, size = 0x4, scoped, tag = 'scoped memory for tpu_custom_call.1']
    #allocation7 [shape = 'u8[8192]{0}', space=vmem, size = 0x2000, scoped, tag = 'input window, operand 3, single buffered']
    #allocation8 [shape = 'u8[8192]{0}', space=vmem, size = 0x2000, scoped, tag = 'output window, operand 0, single buffered']
    %10 = vsyncpa [#allocation3], 0
    %11 = vsyncpa [#allocation6], 0
    %12 = vsyncpa [#allocation4], 0
    // Predicated region
    $region2: #{tpu_custom_call.1} parent=1 // pred_check
      _
    $region3: #{tpu_custom_call.1} parent=1 // pred_check_branch
      %14 = sbr.rel (0) target = $region5
    $region4: #{tpu_custom_call.1} parent=1 // pred_region
      %16 = vsyncadd [#allocation3], 0
      %s17 = sshll.u32 %s0, 4
      %s18 = int_to_ptr.hbm [resolvable:$true] %s17
      %s19 = sshll.u32 [#allocation2], 4
      %s20 = int_to_ptr.vmem [resolvable:$true] %s19
      %25 = dma.hbm_to_vmem [thread:$0]  %s18, 256, %s20, [#allocation3], 128, 128, 8
    $region5: #{tpu_custom_call.1} parent=1 // pred_fallthru
      _
    // Predicated region
    $region6: #{tpu_custom_call.1} parent=1 // pred_check
      _
    $region7: #{tpu_custom_call.1} parent=1 // pred_check_branch
      %27 = sbr.rel (0) target = $region9
    $region8: #{tpu_custom_call.1} parent=1 // pred_region
      %29 = vsyncadd [#allocation6], 0
      %s31 = sshll.u32 %s1, 4
      %s32 = int_to_ptr.hbm [resolvable:$true] %s31
      %s33 = sshll.u32 [#allocation5], 4
      %s34 = int_to_ptr.vmem [resolvable:$true] %s33
      %36 = dma.hbm_to_vmem [thread:$0]  %s32, 16, %s34, [#allocation6]
    $region9: #{tpu_custom_call.1} parent=1 // pred_fallthru
      _
    // Predicated region
    $region10: #{tpu_custom_call.1} parent=1 // pred_check
      _
    $region11: #{tpu_custom_call.1} parent=1 // pred_check_branch
      %38 = sbr.rel (0) target = $region13
    $region12: #{tpu_custom_call.1} parent=1 // pred_region
      _
    $region13: #{tpu_custom_call.1} parent=1 // pred_fallthru
      _
    // Predicated region
    $region14: #{tpu_custom_call.1} parent=1 // pred_check
      _
    $region15: #{tpu_custom_call.1} parent=1 // pred_check_branch
      %40 = sbr.rel (0) target = $region17
    $region16: #{tpu_custom_call.1} parent=1 // pred_region
      %42 = vsyncadd [#allocation6], 0
      %s43 = sshll.u32 %s3, 4
      %s44 = int_to_ptr.hbm [resolvable:$true] %s43
      %s45 = sshll.u32 [#allocation7], 4
      %s46 = int_to_ptr.vmem [resolvable:$true] %s45
      %51 = dma.hbm_to_vmem [thread:$0]  %s44, 256, %s46, [#allocation6], 64, 64, 4
    $region17: #{tpu_custom_call.1} parent=1 // pred_fallthru
      _
    // Predicated region
    $region18: #{tpu_custom_call.1} parent=1 // pred_check
      _
    $region19: #{tpu_custom_call.1} parent=1 // pred_check_branch
      %53 = sbr.rel (0) target = $region21
    $region20: #{tpu_custom_call.1} parent=1 // pred_region
      _
    $region21: #{tpu_custom_call.1} parent=1 // pred_fallthru
      _
    // Predicated region
    $region22: #{tpu_custom_call.1} parent=1 // pred_check
      _
    $region23: #{tpu_custom_call.1} parent=1 // pred_check_branch
      %55 = sbr.rel (0) target = $region25
    $region24: #{tpu_custom_call.1} parent=1 // pred_region
      %57 = dma.done [#allocation3], 256
    $region25: #{tpu_custom_call.1} parent=1 // pred_fallthru
      _
    // Predicated region
    $region26: #{tpu_custom_call.1} parent=1 // pred_check
      _
    $region27: #{tpu_custom_call.1} parent=1 // pred_check_branch
      %59 = sbr.rel (0) target = $region29
    $region28: #{tpu_custom_call.1} parent=1 // pred_region
      %61 = dma.done [#allocation6], 16
    $region29: #{tpu_custom_call.1} parent=1 // pred_fallthru
      _
    // Predicated region
    $region30: #{tpu_custom_call.1} parent=1 // pred_check
      _
    $region31: #{tpu_custom_call.1} parent=1 // pred_check_branch
      %63 = sbr.rel (0) target = $region33
    $region32: #{tpu_custom_call.1} parent=1 // pred_region
      %65 = dma.done [#allocation6], 256
    $region33: #{tpu_custom_call.1} parent=1 // pred_fallthru
      _
    %v67 = vld [vmem:[#allocation2] sm:$0xff]
    %v68 = vld [vmem:[#allocation2 + $0x8] sm:$0xff]
    %vm69 = vcmask 261120
    %v70 = vsel %vm69, %v67, 0.0
    %71 = vadd.xlane.f32.xlu0 %v70
    %v72 = vpop.xlane.xlu0 %71
    %v73 = vsel %vm69, %v68, 0.0
    %74 = vadd.xlane.f32.xlu0 %v73
    %v75 = vpop.xlane.xlu0 %74
    %v76 = vmul.f32 %v72, 0.03125
    %v77 = vmul.f32 %v75, 0.03125
    %v78 = vsub.f32 %v67, %v76
    %v79 = vsub.f32 %v68, %v77
    %v80 = vmul.f32 %v78, %v78
    %v81 = vmul.f32 %v79, %v79
    %v82 = vsel %vm69, %v80, 0.0
    %83 = vadd.xlane.f32.xlu0 %v82
    %v84 = vpop.xlane.xlu0 %83
    %v85 = vsel %vm69, %v81, 0.0
    %86 = vadd.xlane.f32.xlu0 %v85
    %v87 = vpop.xlane.xlu0 %86
    %v88 = vmul.f32 %v84, 0.032258064
    %v89 = vmul.f32 %v87, 0.032258064
    %v90 = vrsqrt.pop %v88
    %v91 = vmul.f32 %v90, %v88
    %v92 = vmul.f32 %v91, %v90
    %v93 = vmul.f32 0.5, %v92
    %v94 = vsub.f32 1.5, %v93
    %v95 = vmul.f32 %v90, %v94
    %v96 = vmul.f32 %v88, %v95
    %vm97 = vcmp.eq.f32.partialorder %v88, inf
    %v98 = vsel %vm97, %v88, %v96
    %vm99 = vcmp.eq.f32.partialorder %v88, 0.0
    %v100 = vand.u32 %v88, 2147483648
    %v101 = vsel %vm99, %v100, %v98
    %v102 = vrsqrt.pop %v89
    %v103 = vmul.f32 %v102, %v89
    %v104 = vmul.f32 %v103, %v102
    %v105 = vmul.f32 0.5, %v104
    %v106 = vsub.f32 1.5, %v105
    %v107 = vmul.f32 %v102, %v106
    %v108 = vmul.f32 %v89, %v107
    %vm109 = vcmp.eq.f32.partialorder %v89, inf
    %v110 = vsel %vm109, %v89, %v108
    %vm111 = vcmp.eq.f32.partialorder %v89, 0.0
    %v112 = vand.u32 %v89, 2147483648
    %v113 = vsel %vm111, %v112, %v110
    %v114 = vadd.f32 %v101, 1e-06
    %v115 = vadd.f32 %v113, 1e-06
    %v116 = vrcp.pop %v114
    %v117 = vrcp.pop %v115
    %v118 = vld [vmem:[#allocation5] sm:$0x1]
    %v120 = vperm.slane %v118, 0
    %v122 = vmul.f32 %v120, %v116
    %v123 = vmul.f32 %v120, %v117
    %v124 = vmul.f32 %v78, %v122
    %v125 = vmul.f32 %v79, %v123
    %v126 = vld [vmem:[%s2] sm:$0x1]
    %v128 = vperm.slane %v126, 0
    %v130 = vadd.f32 %v124, %v128
    %v131 = vadd.f32 %v125, %v128
    %v132 = vpack.c.bf16 %v131, %v130
    %v133 = vld [vmem:[#allocation7] sm:$0xf]
    %v134 = vld [vmem:[#allocation7 + $0x4] sm:$0xf]
    %v135 = vld [vmem:[#allocation7 + $0x8] sm:$0xf]
    %v136 = vld [vmem:[#allocation7 + $0xc] sm:$0xf]
    %v137 = vld [vmem:[%s4] sm:$0x1]
    %v139 = vperm.slane %v137, 0
    %v145 = vunpack.c.l.b16 %v133
    %v146 = vunpack.c.l.b16 %v134
    %v147 = vunpack.c.l.b16 %v135
    %v148 = vunpack.c.l.b16 %v136
    %v149 = vpack.c.b16 %v146, %v145
    %v150 = vpack.c.b16 %v148, %v147
    %v154 = vsel %vm69, %v132, 0
    %156 = vmatpush.bf16.msra.mxu0 0
    %157 = vmatpush.bf16.msra.mxu0 0
    %158 = vmatpush.bf16.msra.mxu0 0
    %159 = vmatpush.bf16.msra.mxu0 0
    %160 = vmatpush.bf16.msra.mxu0 0
    %161 = vmatpush.bf16.msra.mxu0 0
    %162 = vmatpush.bf16.msra.mxu0 %v150
    %163 = vmatpush.bf16.msra.mxu0 %v149
    %164 = vmatmul.bf16.gmra.mxu0 %v154
    %v165 = vpop.f32.mrf.mxu0
    %v166 = vadd.f32 %v139, %v165
    %v167 = vpop.f32.mrf.mxu0
    %v168 = vadd.f32 %v139, %v167
    %169 = vdwg.mxu0
    %v170 = vadd.f32 %v67, %v166
    %v171 = vadd.f32 %v68, %v168
    %172 = vst.msk [vmem:[#allocation8] sm:$0xff] %vm69, %v170
    %173 = vst.msk [vmem:[#allocation8 + $0x8] sm:$0xff] %vm69, %v171
    // Predicated region
    $region34: #{tpu_custom_call.1} parent=1 // pred_check
      _
    $region35: #{tpu_custom_call.1} parent=1 // pred_check_branch
      %175 = sbr.rel (0) target = $region37
    $region36: #{tpu_custom_call.1} parent=1 // pred_region
      %177 = vsyncadd [#allocation4], 0
      %s178 = sshll.u32 [#allocation8], 4
      %s179 = int_to_ptr.vmem [resolvable:$true] %s178
      %s180 = sshll.u32 %s5, 4
      %s181 = int_to_ptr.hbm [resolvable:$true] %s180
      %186 = dma.vmem_to_hbm [thread:$0]  %s179, 256, %s181, [#allocation4], 128, 128, 8
    $region37: #{tpu_custom_call.1} parent=1 // pred_fallthru
      _
    // Predicated region
    $region38: #{tpu_custom_call.1} parent=1 // pred_check
      _
    $region39: #{tpu_custom_call.1} parent=1 // pred_check_branch
      %188 = sbr.rel (0) target = $region41
    $region40: #{tpu_custom_call.1} parent=1 // pred_region
      %190 = dma.done [#allocation4], 256
    $region41: #{tpu_custom_call.1} parent=1 // pred_fallthru
      _
    %191 = vsyncpa [#allocation3], 1
    %192 = vsyncpa [#allocation6], 1
    %193 = vsyncpa [#allocation4], 1

</llo_original>
